<compile_context>
chip_gen: v5e
topology: v5e:2x2
jax: 0.10.0
libtpu: 0.0.40
codegen_flags: <defaults>
</compile_context>

<pallas_src>
import functools

import jax
import jax.numpy as jnp
from jax.experimental import pallas as pl
from jax.experimental.pallas import tpu as pltpu

BN_EPS = 1e-5
L2_EPS = 1e-12


def _round_up(x, m):
    return (x + m - 1) // m * m


def _cdiv(a, b):
    return (a + b - 1) // b


# ---------------------------------------------------------------------------
# Fused kernel: both branches + L2 normalization + temperature-scaled similarity.
# Grid = (M_a tiles,); branch_b is computed once at i == 0 and kept in VMEM scratch.
# ---------------------------------------------------------------------------
def _clip_kernel(x_a_ref, w1a_ref, b1a_ref, w2a_ref, b2a_ref,
                 x_b_ref, w1b_ref, b1b_ref, w2b_ref, b2b_ref,
                 temp_ref,
                 feats_a_ref, feats_b_ref, sim_ref,
                 fb_scratch):
    def branch(x, w1, b1, w2, b2):
        # Linear1 (+ folded eval-mode BN) + ReLU
        h = jnp.dot(x, w1, preferred_element_type=jnp.float32) + b1
        h = jnp.maximum(h, 0.0)
        # Linear2
        y = jnp.dot(h.astype(jnp.bfloat16), w2,
                    preferred_element_type=jnp.float32) + b2
        # Row-wise L2 norm (F.normalize, p=2, eps=1e-12). Padded output columns are
        # exactly zero (weights AND biases are zero-padded) so they don't perturb norms.
        sumsq = jnp.sum(y * y, axis=-1, keepdims=True)
        return y * jax.lax.rsqrt(jnp.maximum(sumsq, L2_EPS * L2_EPS))

    @pl.when(pl.program_id(0) == 0)
    def _():
        fb = branch(x_b_ref[...], w1b_ref[...], b1b_ref[...],
                    w2b_ref[...], b2b_ref[...])
        fb_scratch[...] = fb
        feats_b_ref[...] = fb          # output block has a constant index map -> resident

    fa = branch(x_a_ref[...], w1a_ref[...], b1a_ref[...],
                w2a_ref[...], b2a_ref[...])
    feats_a_ref[...] = fa

    # sim = feats_a @ feats_b.T * temperature  (NT contraction over the last dims, f32)
    sim = jax.lax.dot_general(fa, fb_scratch[...],
                              (((1,), (1,)), ((), ())),
                              preferred_element_type=jnp.float32)
    sim_ref[...] = sim * temp_ref[0]


@functools.partial(jax.jit, static_argnames=("emb_dim",))
def clip_forward(x_a, x_b, params, *, emb_dim):
    pa, pb = params["branch_a"], params["branch_b"]
    Ma, Ka = x_a.shape
    Mb, Kb = x_b.shape
    Ka_p, E_p = pa["w1"].shape
    Kb_p, _ = pb["w1"].shape
    assert Ka <= Ka_p and Kb <= Kb_p

    # Row tiling for branch A / sim rows (multiple of 16 for bf16 sublane packing,
    # sized to avoid gratuitous padding). Branch B is computed whole and held in VMEM,
    # so its row count is padded to a lane-dense multiple of 128 (it is sim's last dim).
    TM_MAX = 256
    n_tiles = _cdiv(Ma, TM_MAX)
    tm = _round_up(_cdiv(Ma, n_tiles), 16)
    Ma_p = n_tiles * tm
    Mb_p = _round_up(Mb, 128)

    xa = jnp.pad(x_a.astype(jnp.float32),
                 ((0, Ma_p - Ma), (0, Ka_p - Ka))).astype(jnp.bfloat16)
    xb = jnp.pad(x_b.astype(jnp.float32),
                 ((0, Mb_p - Mb), (0, Kb_p - Kb))).astype(jnp.bfloat16)
    temp = params["temperature"].reshape(1).astype(jnp.float32)

    flops = 2 * (Ma_p * Ka_p * E_p + Ma_p * E_p * E_p
                 + Mb_p * Kb_p * E_p + Mb_p * E_p * E_p
                 + Ma_p * Mb_p * E_p)
    param_bytes = sum(int(v.size) * v.dtype.itemsize
                      for p in (pa, pb) for v in p.values())
    bytes_accessed = (int(xa.size) + int(xb.size)) * 2 + param_bytes \
        + (Ma_p * E_p + Mb_p * E_p + Ma_p * Mb_p) * 4

    # Rough VMEM need (double-buffered blocks + scratch); keep an explicit limit.
    block_bytes = (
        2 * (tm * Ka_p + Ka_p * E_p + E_p * E_p) * 2        # branch-a inputs (bf16)
        + 2 * (Mb_p * Kb_p + Kb_p * E_p + E_p * E_p) * 2    # branch-b inputs (bf16)
        + 2 * 4 * E_p * 4                                   # biases (f32)
        + 2 * (tm * E_p + Mb_p * E_p + tm * Mb_p) * 4       # outputs (f32)
        + Mb_p * E_p * 4)                                   # feats_b scratch
    vmem_limit = int(min(96 * 1024 * 1024, max(32 * 1024 * 1024, 2 * block_bytes)))

    feats_a, feats_b, sim = pl.pallas_call(
        _clip_kernel,
        out_shape=(
            jax.ShapeDtypeStruct((Ma_p, E_p), jnp.float32),
            jax.ShapeDtypeStruct((Mb_p, E_p), jnp.float32),
            jax.ShapeDtypeStruct((Ma_p, Mb_p), jnp.float32),
        ),
        grid_spec=pltpu.PrefetchScalarGridSpec(
            num_scalar_prefetch=0,
            grid=(n_tiles,),
            in_specs=[
                pl.BlockSpec((tm, Ka_p), lambda i: (i, 0)),       # x_a tile
                pl.BlockSpec((Ka_p, E_p), lambda i: (0, 0)),      # w1a (folded BN)
                pl.BlockSpec((1, E_p), lambda i: (0, 0)),         # b1a
                pl.BlockSpec((E_p, E_p), lambda i: (0, 0)),       # w2a
                pl.BlockSpec((1, E_p), lambda i: (0, 0)),         # b2a
                pl.BlockSpec((Mb_p, Kb_p), lambda i: (0, 0)),     # x_b (whole, resident)
                pl.BlockSpec((Kb_p, E_p), lambda i: (0, 0)),      # w1b
                pl.BlockSpec((1, E_p), lambda i: (0, 0)),         # b1b
                pl.BlockSpec((E_p, E_p), lambda i: (0, 0)),       # w2b
                pl.BlockSpec((1, E_p), lambda i: (0, 0)),         # b2b
                pl.BlockSpec(memory_space=pltpu.MemorySpace.SMEM),  # temperature scalar
            ],
            out_specs=[
                pl.BlockSpec((tm, E_p), lambda i: (i, 0)),        # feats_a
                pl.BlockSpec((Mb_p, E_p), lambda i: (0, 0)),      # feats_b (written at i==0)
                pl.BlockSpec((tm, Mb_p), lambda i: (i, 0)),       # sim
            ],
            scratch_shapes=[pltpu.VMEM((Mb_p, E_p), jnp.float32)],
        ),
        compiler_params=pltpu.CompilerParams(
            # feats_b is produced at i==0 and consumed by later iterations -> sequential.
            dimension_semantics=("arbitrary",),
            vmem_limit_bytes=vmem_limit,
        ),
        cost_estimate=pl.CostEstimate(flops=flops,
                                      transcendentals=Ma_p + Mb_p,
                                      bytes_accessed=bytes_accessed),
    )(xa, pa["w1"], pa["b1"], pa["w2"], pa["b2"],
      xb, pb["w1"], pb["b1"], pb["w2"], pb["b2"], temp)

    return feats_a[:Ma, :emb_dim], feats_b[:Mb, :emb_dim], sim[:Ma, :Mb]


# ---------------------------------------------------------------------------
# Deterministic synthetic parameters (no checkpoint); eval-mode BN folded and
# pre-padded / pre-cast ONCE so no per-forward weight pad/cast ops remain.
# ---------------------------------------------------------------------------
class KeyGen:
    def __init__(self, key):
        self.key = key

    def next(self):
        self.key, sub = jax.random.split(self.key)
        return sub


def _linear_params(kg, in_dim, out_dim):
    w = jax.random.normal(kg.next(), (out_dim, in_dim), jnp.float32) / jnp.sqrt(in_dim)
    b = 0.01 * jax.random.normal(kg.next(), (out_dim,), jnp.float32)
    return w, b


def _bn_fold(c):
    # BatchNorm1d, eval mode with default init/running stats.
    gamma = jnp.ones((c,), jnp.float32)
    beta = jnp.zeros((c,), jnp.float32)
    mean = jnp.zeros((c,), jnp.float32)
    var = jnp.ones((c,), jnp.float32)
    scale = gamma / jnp.sqrt(var + BN_EPS)
    return scale, beta - mean * scale


def make_branch_params(kg, in_dim, emb_dim):
    w1, b1 = _linear_params(kg, in_dim, emb_dim)   # Linear(in_dim, emb)
    scale, shift = _bn_fold(emb_dim)               # BatchNorm1d(emb), eval mode
    w2, b2 = _linear_params(kg, emb_dim, emb_dim)  # Linear(emb, emb)

    # Fold BN affine into linear-1: (x@W1.T + b1)*scale + shift = x@(W1.T*scale) + (b1*scale+shift)
    w1f = jnp.transpose(w1) * scale[None, :]       # (in_dim, emb)
    b1f = b1 * scale + shift
    w2f = jnp.transpose(w2)                        # (emb, emb)
    b2f = b2

    in_p = _round_up(in_dim, 128)
    e_p = _round_up(emb_dim, 128)
    # NOTE: zero padding of BOTH weights and biases is required so that padded output
    # columns stay exactly 0 and the in-kernel row L2 norm is unaffected.
    padded = {
        "w1": jnp.pad(w1f, ((0, in_p - in_dim), (0, e_p - emb_dim))).astype(jnp.bfloat16),
        "b1": jnp.pad(b1f, (0, e_p - emb_dim)).reshape(1, e_p).astype(jnp.float32),
        "w2": jnp.pad(w2f, ((0, e_p - emb_dim), (0, e_p - emb_dim))).astype(jnp.bfloat16),
        "b2": jnp.pad(b2f, (0, e_p - emb_dim)).reshape(1, e_p).astype(jnp.float32),
    }
    ref = {"w1": w1f, "b1": b1f, "w2": w2f, "b2": b2f}
    return padded, ref


def make_params(key, in_dims_a, in_dims_b, emb_dim):
    kg = KeyGen(key)
    pa, ra = make_branch_params(kg, in_dims_a, emb_dim)
    pb, rb = make_branch_params(kg, in_dims_b, emb_dim)
    temp = jnp.float32(1.0)  # nn.Parameter(torch.tensor(1.0))
    params = {"branch_a": pa, "branch_b": pb, "temperature": temp}
    ref_params = {"branch_a": ra, "branch_b": rb, "temperature": temp}
    return params, ref_params


# Pure-JAX f32 reference for correctness checking.
def clip_reference(x_a, x_b, ref_params):
    def branch(x, p):
        h = jnp.maximum(x @ p["w1"] + p["b1"], 0.0)
        y = h @ p["w2"] + p["b2"]
        n = jnp.sqrt(jnp.sum(y * y, axis=-1, keepdims=True))
        return y / jnp.maximum(n, L2_EPS)
    fa = branch(x_a, ref_params["branch_a"])
    fb = branch(x_b, ref_params["branch_b"])
    return fa, fb, (fa @ fb.T) * ref_params["temperature"]


# ---------------------------------------------------------------------------
if __name__ == "__main__":
    key = jax.random.PRNGKey(0)
    k_params, k_a, k_b = jax.random.split(key, 3)

    batch = 8
    input_dims_a = 64
    input_dims_b = 48
    embedding_dims = 32

    params, ref_params = make_params(k_params, input_dims_a, input_dims_b, embedding_dims)
    x_a = jax.random.normal(k_a, (batch, input_dims_a), jnp.float32)
    x_b = jax.random.normal(k_b, (batch, input_dims_b), jnp.float32)

    feats_a, feats_b, sim = clip_forward(x_a, x_b, params, emb_dim=embedding_dims)
    feats_a, feats_b, sim = jax.block_until_ready((feats_a, feats_b, sim))

    assert feats_a.shape == (batch, embedding_dims), feats_a.shape
    assert feats_b.shape == (batch, embedding_dims), feats_b.shape
    assert sim.shape == (batch, batch), sim.shape
    assert bool(jnp.all(jnp.isfinite(feats_a)))
    assert bool(jnp.all(jnp.isfinite(feats_b)))
    assert bool(jnp.all(jnp.isfinite(sim)))

    # Normalized features should have (approximately) unit L2 norm per row.
    norms_a = jnp.linalg.norm(feats_a, axis=-1)
    norms_b = jnp.linalg.norm(feats_b, axis=-1)
    assert bool(jnp.all(jnp.abs(norms_a - 1.0) < 1e-2))
    assert bool(jnp.all(jnp.abs(norms_b - 1.0) < 1e-2))

    # Compare against a pure-f32 JAX reference (branch matmuls use bf16 MXU operands,
    # so allow a loose tolerance).
    ref_a, ref_b, ref_s = clip_reference(x_a, x_b, ref_params)
    assert float(jnp.max(jnp.abs(feats_a - ref_a))) < 5e-2
    assert float(jnp.max(jnp.abs(feats_b - ref_b))) < 5e-2
    assert float(jnp.max(jnp.abs(sim - ref_s))) < 5e-2

    print("KERNEL_OK")
</pallas_src>

<mosaic_0001>
module attributes {stable_mosaic.version = 11 : i64} {
  func.func @_clip_kernel(%arg0: i32, %arg1: memref<16x128xbf16, #tpu.memory_space<vmem>>, %arg2: memref<128x128xbf16, #tpu.memory_space<vmem>>, %arg3: memref<1x128xf32, #tpu.memory_space<vmem>>, %arg4: memref<128x128xbf16, #tpu.memory_space<vmem>>, %arg5: memref<1x128xf32, #tpu.memory_space<vmem>>, %arg6: memref<128x128xbf16, #tpu.memory_space<vmem>>, %arg7: memref<128x128xbf16, #tpu.memory_space<vmem>>, %arg8: memref<1x128xf32, #tpu.memory_space<vmem>>, %arg9: memref<128x128xbf16, #tpu.memory_space<vmem>>, %arg10: memref<1x128xf32, #tpu.memory_space<vmem>>, %arg11: memref<1xf32, #tpu.memory_space<smem>>, %arg12: memref<16x128xf32, #tpu.memory_space<vmem>>, %arg13: memref<128x128xf32, #tpu.memory_space<vmem>>, %arg14: memref<16x128xf32, #tpu.memory_space<vmem>>, %arg15: memref<128x128xf32, #tpu.memory_space<vmem>>) attributes {dimension_semantics = [#tpu.dimension_semantics<arbitrary>], iteration_bounds = array<i64: 1>, scalar_prefetch = 0 : i64, scratch_operands = 1 : i64, tpu.core_type = #tpu.core_type<tc>, window_params = [{transform_indices = @transform_0, window_bounds = array<i64: 16, 128>}, {pipeline_mode = #tpu.pipeline_mode<synchronous>, transform_indices = @transform_1, window_bounds = array<i64: 128, 128>}, {pipeline_mode = #tpu.pipeline_mode<synchronous>, transform_indices = @transform_2, window_bounds = array<i64: 1, 128>}, {pipeline_mode = #tpu.pipeline_mode<synchronous>, transform_indices = @transform_3, window_bounds = array<i64: 128, 128>}, {pipeline_mode = #tpu.pipeline_mode<synchronous>, transform_indices = @transform_4, window_bounds = array<i64: 1, 128>}, {pipeline_mode = #tpu.pipeline_mode<synchronous>, transform_indices = @transform_5, window_bounds = array<i64: 128, 128>}, {pipeline_mode = #tpu.pipeline_mode<synchronous>, transform_indices = @transform_6, window_bounds = array<i64: 128, 128>}, {pipeline_mode = #tpu.pipeline_mode<synchronous>, transform_indices = @transform_7, window_bounds = array<i64: 1, 128>}, {pipeline_mode = #tpu.pipeline_mode<synchronous>, transform_indices = @transform_8, window_bounds = array<i64: 128, 128>}, {pipeline_mode = #tpu.pipeline_mode<synchronous>, transform_indices = @transform_9, window_bounds = array<i64: 1, 128>}, {transform_indices = @transform_10, window_bounds = array<i64: 1>}, {transform_indices = @transform_11, window_bounds = array<i64: 16, 128>}, {pipeline_mode = #tpu.pipeline_mode<synchronous>, transform_indices = @transform_12, window_bounds = array<i64: 128, 128>}, {transform_indices = @transform_13, window_bounds = array<i64: 16, 128>}]} {
    %c0_i32 = arith.constant 0 : i32
    %0 = arith.cmpi eq, %arg0, %c0_i32 : i32
    %1 = arith.extui %0 : i1 to i32
    %c0_i32_0 = arith.constant 0 : i32
    %2 = arith.cmpi ne, %1, %c0_i32_0 : i32
    scf.if %2 {
      %c0_22 = arith.constant 0 : index
      %c0_23 = arith.constant 0 : index
      %32 = vector.load %arg6[%c0_22, %c0_23] : memref<128x128xbf16, #tpu.memory_space<vmem>>, vector<128x128xbf16>
      %c0_24 = arith.constant 0 : index
      %c0_25 = arith.constant 0 : index
      %33 = vector.load %arg7[%c0_24, %c0_25] : memref<128x128xbf16, #tpu.memory_space<vmem>>, vector<128x128xbf16>
      %c0_26 = arith.constant 0 : index
      %c0_27 = arith.constant 0 : index
      %34 = vector.load %arg8[%c0_26, %c0_27] : memref<1x128xf32, #tpu.memory_space<vmem>>, vector<1x128xf32>
      %c0_28 = arith.constant 0 : index
      %c0_29 = arith.constant 0 : index
      %35 = vector.load %arg9[%c0_28, %c0_29] : memref<128x128xbf16, #tpu.memory_space<vmem>>, vector<128x128xbf16>
      %c0_30 = arith.constant 0 : index
      %c0_31 = arith.constant 0 : index
      %36 = vector.load %arg10[%c0_30, %c0_31] : memref<1x128xf32, #tpu.memory_space<vmem>>, vector<1x128xf32>
      %cst_32 = arith.constant dense<0.000000e+00> : vector<128x128xf32>
      %37 = tpu.matmul %32, %33, %cst_32 {dimension_numbers = #tpu.dot_dimension_numbers<[1], [0], [0], [1], [0, 0, 1, 1], [], []>} : vector<128x128xbf16>, vector<128x128xbf16>, vector<128x128xf32> -> vector<128x128xf32>
      %38 = vector.broadcast %34 : vector<1x128xf32> to vector<128x128xf32>
      %39 = arith.addf %37, %38 : vector<128x128xf32>
      %cst_33 = arith.constant 0.000000e+00 : f32
      %40 = vector.broadcast %cst_33 : f32 to vector<128x128xf32>
      %41 = arith.maximumf %39, %40 : vector<128x128xf32>
      %42 = arith.truncf %41 : vector<128x128xf32> to vector<128x128xbf16>
      %cst_34 = arith.constant dense<0.000000e+00> : vector<128x128xf32>
      %43 = tpu.matmul %42, %35, %cst_34 {dimension_numbers = #tpu.dot_dimension_numbers<[1], [0], [0], [1], [0, 0, 1, 1], [], []>} : vector<128x128xbf16>, vector<128x128xbf16>, vector<128x128xf32> -> vector<128x128xf32>
      %44 = vector.broadcast %36 : vector<1x128xf32> to vector<128x128xf32>
      %45 = arith.addf %43, %44 : vector<128x128xf32>
      %46 = arith.mulf %45, %45 : vector<128x128xf32>
      %cst_35 = arith.constant dense<0.000000e+00> : vector<128xf32>
      %47 = vector.multi_reduction <add>, %46, %cst_35 [1] : vector<128x128xf32> to vector<128xf32>
      %48 = vector.shape_cast %47 : vector<128xf32> to vector<128x1xf32>
      %cst_36 = arith.constant 1.000000e-24 : f32
      %49 = vector.broadcast %cst_36 : f32 to vector<128x1xf32>
      %50 = arith.maximumf %48, %49 : vector<128x1xf32>
      %51 = math.rsqrt %50 : vector<128x1xf32>
      %52 = vector.broadcast %51 : vector<128x1xf32> to vector<128x128xf32>
      %53 = arith.mulf %45, %52 : vector<128x128xf32>
      %c0_37 = arith.constant 0 : index
      %c0_38 = arith.constant 0 : index
      %54 = vector.load %arg15[%c0_37, %c0_38] : memref<128x128xf32, #tpu.memory_space<vmem>>, vector<128x128xf32>
      tpu.vector_store %arg15[%c0_37, %c0_38], %53 {strides = array<i32>} : memref<128x128xf32, #tpu.memory_space<vmem>>, vector<128x128xf32>,
      %c0_39 = arith.constant 0 : index
      %c0_40 = arith.constant 0 : index
      %55 = vector.load %arg13[%c0_39, %c0_40] : memref<128x128xf32, #tpu.memory_space<vmem>>, vector<128x128xf32>
      tpu.vector_store %arg13[%c0_39, %c0_40], %53 {strides = array<i32>} : memref<128x128xf32, #tpu.memory_space<vmem>>, vector<128x128xf32>,
    } else {
    }
    %c0 = arith.constant 0 : index
    %c0_1 = arith.constant 0 : index
    %3 = vector.load %arg1[%c0, %c0_1] : memref<16x128xbf16, #tpu.memory_space<vmem>>, vector<16x128xbf16>
    %c0_2 = arith.constant 0 : index
    %c0_3 = arith.constant 0 : index
    %4 = vector.load %arg2[%c0_2, %c0_3] : memref<128x128xbf16, #tpu.memory_space<vmem>>, vector<128x128xbf16>
    %c0_4 = arith.constant 0 : index
    %c0_5 = arith.constant 0 : index
    %5 = vector.load %arg3[%c0_4, %c0_5] : memref<1x128xf32, #tpu.memory_space<vmem>>, vector<1x128xf32>
    %c0_6 = arith.constant 0 : index
    %c0_7 = arith.constant 0 : index
    %6 = vector.load %arg4[%c0_6, %c0_7] : memref<128x128xbf16, #tpu.memory_space<vmem>>, vector<128x128xbf16>
    %c0_8 = arith.constant 0 : index
    %c0_9 = arith.constant 0 : index
    %7 = vector.load %arg5[%c0_8, %c0_9] : memref<1x128xf32, #tpu.memory_space<vmem>>, vector<1x128xf32>
    %cst = arith.constant dense<0.000000e+00> : vector<16x128xf32>
    %8 = tpu.matmul %3, %4, %cst {dimension_numbers = #tpu.dot_dimension_numbers<[1], [0], [0], [1], [0, 0, 1, 1], [], []>} : vector<16x128xbf16>, vector<128x128xbf16>, vector<16x128xf32> -> vector<16x128xf32>
    %9 = vector.broadcast %5 : vector<1x128xf32> to vector<16x128xf32>
    %10 = arith.addf %8, %9 : vector<16x128xf32>
    %cst_10 = arith.constant 0.000000e+00 : f32
    %11 = vector.broadcast %cst_10 : f32 to vector<16x128xf32>
    %12 = arith.maximumf %10, %11 : vector<16x128xf32>
    %13 = arith.truncf %12 : vector<16x128xf32> to vector<16x128xbf16>
    %cst_11 = arith.constant dense<0.000000e+00> : vector<16x128xf32>
    %14 = tpu.matmul %13, %6, %cst_11 {dimension_numbers = #tpu.dot_dimension_numbers<[1], [0], [0], [1], [0, 0, 1, 1], [], []>} : vector<16x128xbf16>, vector<128x128xbf16>, vector<16x128xf32> -> vector<16x128xf32>
    %15 = vector.broadcast %7 : vector<1x128xf32> to vector<16x128xf32>
    %16 = arith.addf %14, %15 : vector<16x128xf32>
    %17 = arith.mulf %16, %16 : vector<16x128xf32>
    %cst_12 = arith.constant dense<0.000000e+00> : vector<16xf32>
    %18 = vector.multi_reduction <add>, %17, %cst_12 [1] : vector<16x128xf32> to vector<16xf32>
    %19 = vector.shape_cast %18 : vector<16xf32> to vector<16x1xf32>
    %cst_13 = arith.constant 1.000000e-24 : f32
    %20 = vector.broadcast %cst_13 : f32 to vector<16x1xf32>
    %21 = arith.maximumf %19, %20 : vector<16x1xf32>
    %22 = math.rsqrt %21 : vector<16x1xf32>
    %23 = vector.broadcast %22 : vector<16x1xf32> to vector<16x128xf32>
    %24 = arith.mulf %16, %23 : vector<16x128xf32>
    %c0_14 = arith.constant 0 : index
    %c0_15 = arith.constant 0 : index
    %25 = vector.load %arg12[%c0_14, %c0_15] : memref<16x128xf32, #tpu.memory_space<vmem>>, vector<16x128xf32>
    tpu.vector_store %arg12[%c0_14, %c0_15], %24 {strides = array<i32>} : memref<16x128xf32, #tpu.memory_space<vmem>>, vector<16x128xf32>,
    %c0_16 = arith.constant 0 : index
    %c0_17 = arith.constant 0 : index
    %26 = vector.load %arg15[%c0_16, %c0_17] : memref<128x128xf32, #tpu.memory_space<vmem>>, vector<128x128xf32>
    %cst_18 = arith.constant dense<0.000000e+00> : vector<16x128xf32>
    %27 = tpu.matmul %24, %26, %cst_18 {dimension_numbers = #tpu.dot_dimension_numbers<[1], [1], [0], [0], [0, 0, 1, 0], [], []>} : vector<16x128xf32>, vector<128x128xf32>, vector<16x128xf32> -> vector<16x128xf32>
    %c0_19 = arith.constant 0 : index
    %28 = memref.load %arg11[%c0_19] : memref<1xf32, #tpu.memory_space<smem>>
    %29 = vector.broadcast %28 : f32 to vector<16x128xf32>
    %30 = arith.mulf %27, %29 : vector<16x128xf32>
    %c0_20 = arith.constant 0 : index
    %c0_21 = arith.constant 0 : index
    %31 = vector.load %arg14[%c0_20, %c0_21] : memref<16x128xf32, #tpu.memory_space<vmem>>, vector<16x128xf32>
    tpu.vector_store %arg14[%c0_20, %c0_21], %30 {strides = array<i32>} : memref<16x128xf32, #tpu.memory_space<vmem>>, vector<16x128xf32>,
    return
  }
  func.func @transform_0(%arg0: i32) -> (i32, i32) {
    %c0_i32 = arith.constant 0 : i32
    %c0_i32_0 = arith.constant 0 : i32
    return %arg0, %c0_i32 : i32, i32
  }
  func.func @transform_1(%arg0: i32) -> (i32, i32) {
    %c0_i32 = arith.constant 0 : i32
    %c0_i32_0 = arith.constant 0 : i32
    %c0_i32_1 = arith.constant 0 : i32
    return %c0_i32, %c0_i32_0 : i32, i32
  }
  func.func @transform_2(%arg0: i32) -> (i32, i32) {
    %c0_i32 = arith.constant 0 : i32
    %c0_i32_0 = arith.constant 0 : i32
    %c0_i32_1 = arith.constant 0 : i32
    return %c0_i32, %c0_i32_0 : i32, i32
  }
  func.func @transform_3(%arg0: i32) -> (i32, i32) {
    %c0_i32 = arith.constant 0 : i32
    %c0_i32_0 = arith.constant 0 : i32
    %c0_i32_1 = arith.constant 0 : i32
    return %c0_i32, %c0_i32_0 : i32, i32
  }
  func.func @transform_4(%arg0: i32) -> (i32, i32) {
    %c0_i32 = arith.constant 0 : i32
    %c0_i32_0 = arith.constant 0 : i32
    %c0_i32_1 = arith.constant 0 : i32
    return %c0_i32, %c0_i32_0 : i32, i32
  }
  func.func @transform_5(%arg0: i32) -> (i32, i32) {
    %c0_i32 = arith.constant 0 : i32
    %c0_i32_0 = arith.constant 0 : i32
    %c0_i32_1 = arith.constant 0 : i32
    return %c0_i32, %c0_i32_0 : i32, i32
  }
  func.func @transform_6(%arg0: i32) -> (i32, i32) {
    %c0_i32 = arith.constant 0 : i32
    %c0_i32_0 = arith.constant 0 : i32
    %c0_i32_1 = arith.constant 0 : i32
    return %c0_i32, %c0_i32_0 : i32, i32
  }
  func.func @transform_7(%arg0: i32) -> (i32, i32) {
    %c0_i32 = arith.constant 0 : i32
    %c0_i32_0 = arith.constant 0 : i32
    %c0_i32_1 = arith.constant 0 : i32
    return %c0_i32, %c0_i32_0 : i32, i32
  }
  func.func @transform_8(%arg0: i32) -> (i32, i32) {
    %c0_i32 = arith.constant 0 : i32
    %c0_i32_0 = arith.constant 0 : i32
    %c0_i32_1 = arith.constant 0 : i32
    return %c0_i32, %c0_i32_0 : i32, i32
  }
  func.func @transform_9(%arg0: i32) -> (i32, i32) {
    %c0_i32 = arith.constant 0 : i32
    %c0_i32_0 = arith.constant 0 : i32
    %c0_i32_1 = arith.constant 0 : i32
    return %c0_i32, %c0_i32_0 : i32, i32
  }
  func.func @transform_10(%arg0: i32) -> i32 {
    %c0_i32 = arith.constant 0 : i32
    %c0_i32_0 = arith.constant 0 : i32
    return %c0_i32 : i32
  }
  func.func @transform_11(%arg0: i32) -> (i32, i32) {
    %c0_i32 = arith.constant 0 : i32
    %c0_i32_0 = arith.constant 0 : i32
    return %arg0, %c0_i32 : i32, i32
  }
  func.func @transform_12(%arg0: i32) -> (i32, i32) {
    %c0_i32 = arith.constant 0 : i32
    %c0_i32_0 = arith.constant 0 : i32
    %c0_i32_1 = arith.constant 0 : i32
    return %c0_i32, %c0_i32_0 : i32, i32
  }
  func.func @transform_13(%arg0: i32) -> (i32, i32) {
    %c0_i32 = arith.constant 0 : i32
    %c0_i32_0 = arith.constant 0 : i32
    return %arg0, %c0_i32 : i32, i32
  }
}

</mosaic_0001>

<llo_original>
// kernel: clip_forward.1
$region0: #{clip_forward.1}
  #allocation0 [shape = 'u32[]', space=smem, size = 0x4, offset = 0x4, fixed_abs, tag = 'smem constant byte address 0x4 - core index']
  #allocation1 [shape = 'u32[72,128]{1,0:T(1,128)}', space=vmem, size = 0x9000, scoped, tag = 'internal scratch']
  #allocation2 [shape = 'f32[128,128]{1,0:T(8,128)}', space=vmem, size = 0x10000, scoped, tag = 'scratch operand']
  #allocation3 [shape = 'f32[1]{0:T(128)S(6)}', space=smem, size = 0x200, scoped, tag = 'scoped memory for clip_forward.1']
  %s0 = inlined_call_operand.vmem [shape: bf16[16,128], index: 0, kind: input, shape index: {}]
  %s1 = inlined_call_operand.vmem [shape: bf16[128,128], index: 1, kind: input, shape index: {}]
  %s2 = inlined_call_operand.vmem [shape: f32[1,128], index: 2, kind: input, shape index: {}]
  %s3 = inlined_call_operand.hbm [shape: bf16[128,128], index: 3, kind: input, shape index: {}]
  %s4 = inlined_call_operand.vmem [shape: f32[1,128], index: 4, kind: input, shape index: {}]
  %s5 = inlined_call_operand.vmem [shape: bf16[128,128], index: 5, kind: input, shape index: {}]
  %s6 = inlined_call_operand.hbm [shape: bf16[128,128], index: 6, kind: input, shape index: {}]
  %s7 = inlined_call_operand.vmem [shape: f32[1,128], index: 7, kind: input, shape index: {}]
  %s8 = inlined_call_operand.hbm [shape: bf16[128,128], index: 8, kind: input, shape index: {}]
  %s9 = inlined_call_operand.vmem [shape: f32[1,128], index: 9, kind: input, shape index: {}]
  %s10 = inlined_call_operand.<no memory space> [shape: f32[1], index: 10, kind: input, shape index: {}]
  %s11 = inlined_call_operand.vmem [shape: f32[16,128], index: 11, kind: output, shape index: {0}]
  %s12 = inlined_call_operand.vmem [shape: f32[128,128], index: 12, kind: output, shape index: {1}]
  %s13 = inlined_call_operand.vmem [shape: f32[16,128], index: 13, kind: output, shape index: {2}]
  %14 = xla_tuple %s11, %s12, %s13
  %s15 = sld [smem:[#allocation0]]
  $region86: #{clip_forward.1} parent=0
    _
  %s17 = ssub.s32 1, %s15
  %s18 = scalar_select 0, %s17, %s15
  %19 = sst [smem:[#allocation3]] %s10
  $region1: #{clip_forward.1} parent=0
    #allocation4 [shape = 'u8[32768]{0}', space=vmem, size = 0x8000, scoped, tag = 'input window, operand 3, single buffered']
    #allocation5 [shape = 's32[1]{0}', space=sflag, size = 0x4, scoped, tag = 'scoped memory for clip_forward.1']
    #allocation6 [shape = 'u8[32768]{0}', space=vmem, size = 0x8000, scoped, tag = 'input window, operand 6, single buffered']
    #allocation7 [shape = 's32[1]{0}', space=sflag, size = 0x4, scoped, tag = 'scoped memory for clip_forward.1']
    #allocation8 [shape = 'u8[32768]{0}', space=vmem, size = 0x8000, scoped, tag = 'input window, operand 8, single buffered']
    %20 = vsyncpa [#allocation5], 0
    %21 = vsyncpa [#allocation7], 0
    // Predicated region
    $region2: #{clip_forward.1} parent=1 // pred_check
      _
    $region3: #{clip_forward.1} parent=1 // pred_check_branch
      %23 = sbr.rel (0) target = $region5
    $region4: #{clip_forward.1} parent=1 // pred_region
      _
    $region5: #{clip_forward.1} parent=1 // pred_fallthru
      _
    // Predicated region
    $region6: #{clip_forward.1} parent=1 // pred_check
      _
    $region7: #{clip_forward.1} parent=1 // pred_check_branch
      %25 = sbr.rel (0) target = $region9
    $region8: #{clip_forward.1} parent=1 // pred_region
      _
    $region9: #{clip_forward.1} parent=1 // pred_fallthru
      _
    // Predicated region
    $region10: #{clip_forward.1} parent=1 // pred_check
      _
    $region11: #{clip_forward.1} parent=1 // pred_check_branch
      %27 = sbr.rel (0) target = $region13
    $region12: #{clip_forward.1} parent=1 // pred_region
      _
    $region13: #{clip_forward.1} parent=1 // pred_fallthru
      _
    // Predicated region
    $region14: #{clip_forward.1} parent=1 // pred_check
      _
    $region15: #{clip_forward.1} parent=1 // pred_check_branch
      %29 = sbr.rel (0) target = $region17
    $region16: #{clip_forward.1} parent=1 // pred_region
      %31 = vsyncadd [#allocation5], 0
      %s32 = sshll.u32 %s3, 4
      %s33 = int_to_ptr.hbm [resolvable:$true] %s32
      %s34 = sshll.u32 [#allocation4], 4
      %s35 = int_to_ptr.vmem [resolvable:$true] %s34
      %40 = dma.hbm_to_vmem [thread:$0]  %s33, 1024, %s35, [#allocation5], 64, 64, 4
    $region17: #{clip_forward.1} parent=1 // pred_fallthru
      _
    // Predicated region
    $region18: #{clip_forward.1} parent=1 // pred_check
      _
    $region19: #{clip_forward.1} parent=1 // pred_check_branch
      %42 = sbr.rel (0) target = $region21
    $region20: #{clip_forward.1} parent=1 // pred_region
      _
    $region21: #{clip_forward.1} parent=1 // pred_fallthru
      _
    // Predicated region
    $region22: #{clip_forward.1} parent=1 // pred_check
      _
    $region23: #{clip_forward.1} parent=1 // pred_check_branch
      %44 = sbr.rel (0) target = $region25
    $region24: #{clip_forward.1} parent=1 // pred_region
      _
    $region25: #{clip_forward.1} parent=1 // pred_fallthru
      _
    // Predicated region
    $region26: #{clip_forward.1} parent=1 // pred_check
      _
    $region27: #{clip_forward.1} parent=1 // pred_check_branch
      %46 = sbr.rel (0) target = $region29
    $region28: #{clip_forward.1} parent=1 // pred_region
      %48 = vsyncadd [#allocation7], 0
      %s49 = sshll.u32 %s6, 4
      %s50 = int_to_ptr.hbm [resolvable:$true] %s49
      %s51 = sshll.u32 [#allocation6], 4
      %s52 = int_to_ptr.vmem [resolvable:$true] %s51
      %57 = dma.hbm_to_vmem [thread:$0]  %s50, 1024, %s52, [#allocation7], 64, 64, 4
    $region29: #{clip_forward.1} parent=1 // pred_fallthru
      _
    // Predicated region
    $region30: #{clip_forward.1} parent=1 // pred_check
      _
    $region31: #{clip_forward.1} parent=1 // pred_check_branch
      %59 = sbr.rel (0) target = $region33
    $region32: #{clip_forward.1} parent=1 // pred_region
      _
    $region33: #{clip_forward.1} parent=1 // pred_fallthru
      _
    // Predicated region
    $region34: #{clip_forward.1} parent=1 // pred_check
      _
    $region35: #{clip_forward.1} parent=1 // pred_check_branch
      %61 = sbr.rel (0) target = $region37
    $region36: #{clip_forward.1} parent=1 // pred_region
      %63 = vsyncadd [#allocation7], 0
      %s64 = sshll.u32 %s8, 4
      %s65 = int_to_ptr.hbm [resolvable:$true] %s64
      %s66 = sshll.u32 [#allocation8], 4
      %s67 = int_to_ptr.vmem [resolvable:$true] %s66
      %72 = dma.hbm_to_vmem [thread:$0]  %s65, 1024, %s67, [#allocation7], 64, 64, 4
    $region37: #{clip_forward.1} parent=1 // pred_fallthru
      _
    // Predicated region
    $region38: #{clip_forward.1} parent=1 // pred_check
      _
    $region39: #{clip_forward.1} parent=1 // pred_check_branch
      %74 = sbr.rel (0) target = $region41
    $region40: #{clip_forward.1} parent=1 // pred_region
      _
    $region41: #{clip_forward.1} parent=1 // pred_fallthru
      _
    // Predicated region
    $region42: #{clip_forward.1} parent=1 // pred_check
      _
    $region43: #{clip_forward.1} parent=1 // pred_check_branch
      %76 = sbr.rel (0) target = $region45
    $region44: #{clip_forward.1} parent=1 // pred_region
      _
    $region45: #{clip_forward.1} parent=1 // pred_fallthru
      _
    // Predicated region
    $region46: #{clip_forward.1} parent=1 // pred_check
      _
    $region47: #{clip_forward.1} parent=1 // pred_check_branch
      %78 = sbr.rel (0) target = $region49
    $region48: #{clip_forward.1} parent=1 // pred_region
      %80 = dma.done [#allocation5], 1024
    $region49: #{clip_forward.1} parent=1 // pred_fallthru
      _
    // Predicated region
    $region50: #{clip_forward.1} parent=1 // pred_check
      _
    $region51: #{clip_forward.1} parent=1 // pred_check_branch
      %82 = sbr.rel (0) target = $region53
    $region52: #{clip_forward.1} parent=1 // pred_region
      %84 = dma.done [#allocation7], 1024
    $region53: #{clip_forward.1} parent=1 // pred_fallthru
      _
    // Predicated region
    $region54: #{clip_forward.1} parent=1 // pred_check
      _
    $region55: #{clip_forward.1} parent=1 // pred_check_branch
      %86 = sbr.rel (0) target = $region57
    $region56: #{clip_forward.1} parent=1 // pred_region
      %88 = dma.done [#allocation7], 1024
    $region57: #{clip_forward.1} parent=1 // pred_fallthru
      _
    %p89 = scmp.eq.s32.totalorder 0, 0
    // Predicated region
    $region58: #{clip_forward.1} parent=1 // pred_check
      %p90 = pneg %p89
    $region59: #{clip_forward.1} parent=1 // pred_check_branch
      %92 = sbr.rel (%p90) target = $region61
    $region60: #{clip_forward.1} parent=1 // pred_region
      %v93 = vld [vmem:[%s5] sm:$0xf]
      %v94 = vld [vmem:[%s5 + $0x4] sm:$0xf]
      %v95 = vld [vmem:[%s5 + $0x8] sm:$0xf]
      %v96 = vld [vmem:[%s5 + $0xc] sm:$0xf]
      %v97 = vld [vmem:[%s5 + $0x10] sm:$0xf]
      %v98 = vld [vmem:[%s5 + $0x14] sm:$0xf]
      %v99 = vld [vmem:[%s5 + $0x18] sm:$0xf]
      %v100 = vld [vmem:[%s5 + $0x1c] sm:$0xf]
      %v101 = vld [vmem:[%s5 + $0x20] sm:$0xf]
      %v102 = vld [vmem:[%s5 + $0x24] sm:$0xf]
      %v103 = vld [vmem:[%s5 + $0x28] sm:$0xf]
      %v104 = vld [vmem:[%s5 + $0x2c] sm:$0xf]
      %v105 = vld [vmem:[%s5 + $0x30] sm:$0xf]
      %v106 = vld [vmem:[%s5 + $0x34] sm:$0xf]
      %v107 = vld [vmem:[%s5 + $0x38] sm:$0xf]
      %v108 = vld [vmem:[%s5 + $0x3c] sm:$0xf]
      %v109 = vld [vmem:[#allocation6] sm:$0xf]
      %v110 = vld [vmem:[#allocation6 + $0x4] sm:$0xf]
      %v111 = vld [vmem:[#allocation6 + $0x8] sm:$0xf]
      %v112 = vld [vmem:[#allocation6 + $0xc] sm:$0xf]
      %v113 = vld [vmem:[#allocation6 + $0x10] sm:$0xf]
      %v114 = vld [vmem:[#allocation6 + $0x14] sm:$0xf]
      %v115 = vld [vmem:[#allocation6 + $0x18] sm:$0xf]
      %v116 = vld [vmem:[#allocation6 + $0x1c] sm:$0xf]
      %v117 = vld [vmem:[#allocation6 + $0x20] sm:$0xf]
      %v118 = vld [vmem:[#allocation6 + $0x24] sm:$0xf]
      %v119 = vld [vmem:[#allocation6 + $0x28] sm:$0xf]
      %v120 = vld [vmem:[#allocation6 + $0x2c] sm:$0xf]
      %v121 = vld [vmem:[#allocation6 + $0x30] sm:$0xf]
      %v122 = vld [vmem:[#allocation6 + $0x34] sm:$0xf]
      %v123 = vld [vmem:[#allocation6 + $0x38] sm:$0xf]
      %v124 = vld [vmem:[#allocation6 + $0x3c] sm:$0xf]
      %v125 = vld [vmem:[%s7] sm:$0x1]
      %v126 = vld [vmem:[#allocation8] sm:$0xf]
      %v127 = vld [vmem:[#allocation8 + $0x4] sm:$0xf]
      %v128 = vld [vmem:[#allocation8 + $0x8] sm:$0xf]
      %v129 = vld [vmem:[#allocation8 + $0xc] sm:$0xf]
      %v130 = vld [vmem:[#allocation8 + $0x10] sm:$0xf]
      %v131 = vld [vmem:[#allocation8 + $0x14] sm:$0xf]
      %v132 = vld [vmem:[#allocation8 + $0x18] sm:$0xf]
      %v133 = vld [vmem:[#allocation8 + $0x1c] sm:$0xf]
      %v134 = vld [vmem:[#allocation8 + $0x20] sm:$0xf]
      %v135 = vld [vmem:[#allocation8 + $0x24] sm:$0xf]
      %v136 = vld [vmem:[#allocation8 + $0x28] sm:$0xf]
      %v137 = vld [vmem:[#allocation8 + $0x2c] sm:$0xf]
      %v138 = vld [vmem:[#allocation8 + $0x30] sm:$0xf]
      %v139 = vld [vmem:[#allocation8 + $0x34] sm:$0xf]
      %v140 = vld [vmem:[#allocation8 + $0x38] sm:$0xf]
      %v141 = vld [vmem:[#allocation8 + $0x3c] sm:$0xf]
      %v142 = vld [vmem:[%s9] sm:$0x1]
      %v144 = vperm.slane %v125, 0
      %v162 = vunpack.c.l.b16 %v93
      %v163 = vunpack.c.l.b16 %v94
      %v164 = vunpack.c.l.b16 %v95
      %v165 = vunpack.c.l.b16 %v96
      %v166 = vunpack.c.l.b16 %v97
      %v167 = vunpack.c.l.b16 %v98
      %v168 = vunpack.c.l.b16 %v99
      %v169 = vunpack.c.l.b16 %v100
      %v170 = vunpack.c.l.b16 %v101
      %v171 = vunpack.c.l.b16 %v102
      %v172 = vunpack.c.l.b16 %v103
      %v173 = vunpack.c.l.b16 %v104
      %v174 = vunpack.c.l.b16 %v105
      %v175 = vunpack.c.l.b16 %v106
      %v176 = vunpack.c.l.b16 %v107
      %v177 = vunpack.c.l.b16 %v108
      %v178 = vpack.c.b16 %v163, %v162
      %v179 = vpack.c.b16 %v165, %v164
      %v180 = vpack.c.b16 %v167, %v166
      %v181 = vpack.c.b16 %v169, %v168
      %v182 = vpack.c.b16 %v171, %v170
      %v183 = vpack.c.b16 %v173, %v172
      %v184 = vpack.c.b16 %v175, %v174
      %v185 = vpack.c.b16 %v177, %v176
      %v210 = vunpack.c.l.b16 %v109
      %v211 = vunpack.c.l.b16 %v110
      %v212 = vunpack.c.l.b16 %v111
      %v213 = vunpack.c.l.b16 %v112
      %v214 = vunpack.c.l.b16 %v113
      %v215 = vunpack.c.l.b16 %v114
      %v216 = vunpack.c.l.b16 %v115
      %v217 = vunpack.c.l.b16 %v116
      %v218 = vunpack.c.l.b16 %v117
      %v219 = vunpack.c.l.b16 %v118
      %v220 = vunpack.c.l.b16 %v119
      %v221 = vunpack.c.l.b16 %v120
      %v222 = vunpack.c.l.b16 %v121
      %v223 = vunpack.c.l.b16 %v122
      %v224 = vunpack.c.l.b16 %v123
      %v225 = vunpack.c.l.b16 %v124
      %v226 = vpack.c.b16 %v211, %v210
      %v227 = vpack.c.b16 %v213, %v212
      %v228 = vpack.c.b16 %v215, %v214
      %v229 = vpack.c.b16 %v217, %v216
      %v230 = vpack.c.b16 %v219, %v218
      %v231 = vpack.c.b16 %v221, %v220
      %v232 = vpack.c.b16 %v223, %v222
      %v233 = vpack.c.b16 %v225, %v224
      %242 = vmatpush.bf16.msra.mxu0 %v233
      %243 = vmatpush.bf16.msra.mxu0 %v232
      %244 = vmatpush.bf16.msra.mxu0 %v231
      %245 = vmatpush.bf16.msra.mxu0 %v230
      %246 = vmatpush.bf16.msra.mxu0 %v229
      %247 = vmatpush.bf16.msra.mxu0 %v228
      %248 = vmatpush.bf16.msra.mxu0 %v227
      %249 = vmatpush.bf16.msra.mxu0 %v226
      %250 = vmatmul.bf16.gmra.mxu0 %v178
      %v251 = vpop.f32.mrf.mxu0
      %v252 = vadd.f32 %v144, %v251
      %v253 = vpop.f32.mrf.mxu0
      %v254 = vadd.f32 %v144, %v253
      %255 = vmatmul.bf16.gmra.mxu0 %v179
      %v256 = vpop.f32.mrf.mxu0
      %v257 = vadd.f32 %v144, %v256
      %v258 = vpop.f32.mrf.mxu0
      %v259 = vadd.f32 %v144, %v258
      %260 = vmatmul.bf16.gmra.mxu0 %v180
      %v261 = vpop.f32.mrf.mxu0
      %v262 = vadd.f32 %v144, %v261
      %v263 = vpop.f32.mrf.mxu0
      %v264 = vadd.f32 %v144, %v263
      %265 = vmatmul.bf16.gmra.mxu0 %v181
      %v266 = vpop.f32.mrf.mxu0
      %v267 = vadd.f32 %v144, %v266
      %v268 = vpop.f32.mrf.mxu0
      %v269 = vadd.f32 %v144, %v268
      %270 = vmatmul.bf16.gmra.mxu0 %v182
      %v271 = vpop.f32.mrf.mxu0
      %v272 = vadd.f32 %v144, %v271
      %v273 = vpop.f32.mrf.mxu0
      %v274 = vadd.f32 %v144, %v273
      %275 = vmatmul.bf16.gmra.mxu0 %v183
      %v276 = vpop.f32.mrf.mxu0
      %v277 = vadd.f32 %v144, %v276
      %v278 = vpop.f32.mrf.mxu0
      %v279 = vadd.f32 %v144, %v278
      %280 = vmatmul.bf16.gmra.mxu0 %v184
      %v281 = vpop.f32.mrf.mxu0
      %v282 = vadd.f32 %v144, %v281
      %v283 = vpop.f32.mrf.mxu0
      %v284 = vadd.f32 %v144, %v283
      %285 = vmatmul.bf16.gmra.mxu0 %v185
      %v286 = vpop.f32.mrf.mxu0
      %v287 = vadd.f32 %v144, %v286
      %v288 = vpop.f32.mrf.mxu0
      %v289 = vadd.f32 %v144, %v288
      %290 = vdwg.mxu0
      %v291 = vmax.f32 %v252, 0.0
      %v292 = vmax.f32 %v254, 0.0
      %v293 = vmax.f32 %v257, 0.0
      %v294 = vmax.f32 %v259, 0.0
      %v295 = vmax.f32 %v262, 0.0
      %v296 = vmax.f32 %v264, 0.0
      %v297 = vmax.f32 %v267, 0.0
      %v298 = vmax.f32 %v269, 0.0
      %v299 = vmax.f32 %v272, 0.0
      %v300 = vmax.f32 %v274, 0.0
      %v301 = vmax.f32 %v277, 0.0
      %v302 = vmax.f32 %v279, 0.0
      %v303 = vmax.f32 %v282, 0.0
      %v304 = vmax.f32 %v284, 0.0
      %v305 = vmax.f32 %v287, 0.0
      %v306 = vmax.f32 %v289, 0.0
      %v307 = vpack.c.bf16 %v292, %v291
      %v308 = vpack.c.bf16 %v294, %v293
      %v309 = vpack.c.bf16 %v296, %v295
      %v310 = vpack.c.bf16 %v298, %v297
      %v311 = vpack.c.bf16 %v300, %v299
      %v312 = vpack.c.bf16 %v302, %v301
      %v313 = vpack.c.bf16 %v304, %v303
      %v314 = vpack.c.bf16 %v306, %v305
      %v316 = vperm.slane %v142, 0
      %v334 = vunpack.c.l.b16 %v126
      %v335 = vunpack.c.l.b16 %v127
      %v336 = vunpack.c.l.b16 %v128
      %v337 = vunpack.c.l.b16 %v129
      %v338 = vunpack.c.l.b16 %v130
      %v339 = vunpack.c.l.b16 %v131
      %v340 = vunpack.c.l.b16 %v132
      %v341 = vunpack.c.l.b16 %v133
      %v342 = vunpack.c.l.b16 %v134
      %v343 = vunpack.c.l.b16 %v135
      %v344 = vunpack.c.l.b16 %v136
      %v345 = vunpack.c.l.b16 %v137
      %v346 = vunpack.c.l.b16 %v138
      %v347 = vunpack.c.l.b16 %v139
      %v348 = vunpack.c.l.b16 %v140
      %v349 = vunpack.c.l.b16 %v141
      %v350 = vpack.c.b16 %v335, %v334
      %v351 = vpack.c.b16 %v337, %v336
      %v352 = vpack.c.b16 %v339, %v338
      %v353 = vpack.c.b16 %v341, %v340
      %v354 = vpack.c.b16 %v343, %v342
      %v355 = vpack.c.b16 %v345, %v344
      %v356 = vpack.c.b16 %v347, %v346
      %v357 = vpack.c.b16 %v349, %v348
      %366 = vmatpush.bf16.msra.mxu0 %v357
      %367 = vmatpush.bf16.msra.mxu0 %v356
      %368 = vmatpush.bf16.msra.mxu0 %v355
      %369 = vmatpush.bf16.msra.mxu0 %v354
      %370 = vmatpush.bf16.msra.mxu0 %v353
      %371 = vmatpush.bf16.msra.mxu0 %v352
      %372 = vmatpush.bf16.msra.mxu0 %v351
      %373 = vmatpush.bf16.msra.mxu0 %v350
      %374 = vmatmul.bf16.gmra.mxu0 %v307
      %v375 = vpop.f32.mrf.mxu0
      %v376 = vadd.f32 %v316, %v375
      %v377 = vpop.f32.mrf.mxu0
      %v378 = vadd.f32 %v316, %v377
      %379 = vmatmul.bf16.gmra.mxu0 %v308
      %v380 = vpop.f32.mrf.mxu0
      %v381 = vadd.f32 %v316, %v380
      %v382 = vpop.f32.mrf.mxu0
      %v383 = vadd.f32 %v316, %v382
      %384 = vmatmul.bf16.gmra.mxu0 %v309
      %v385 = vpop.f32.mrf.mxu0
      %v386 = vadd.f32 %v316, %v385
      %v387 = vpop.f32.mrf.mxu0
      %v388 = vadd.f32 %v316, %v387
      %389 = vmatmul.bf16.gmra.mxu0 %v310
      %v390 = vpop.f32.mrf.mxu0
      %v391 = vadd.f32 %v316, %v390
      %v392 = vpop.f32.mrf.mxu0
      %v393 = vadd.f32 %v316, %v392
      %394 = vmatmul.bf16.gmra.mxu0 %v311
      %v395 = vpop.f32.mrf.mxu0
      %v396 = vadd.f32 %v316, %v395
      %v397 = vpop.f32.mrf.mxu0
      %v398 = vadd.f32 %v316, %v397
      %399 = vmatmul.bf16.gmra.mxu0 %v312
      %v400 = vpop.f32.mrf.mxu0
      %v401 = vadd.f32 %v316, %v400
      %v402 = vpop.f32.mrf.mxu0
      %v403 = vadd.f32 %v316, %v402
      %404 = vmatmul.bf16.gmra.mxu0 %v313
      %v405 = vpop.f32.mrf.mxu0
      %v406 = vadd.f32 %v316, %v405
      %v407 = vpop.f32.mrf.mxu0
      %v408 = vadd.f32 %v316, %v407
      %409 = vmatmul.bf16.gmra.mxu0 %v314
      %v410 = vpop.f32.mrf.mxu0
      %v411 = vadd.f32 %v316, %v410
      %v412 = vpop.f32.mrf.mxu0
      %v413 = vadd.f32 %v316, %v412
      %414 = vdwg.mxu0
      %v415 = vmul.f32 %v376, %v376
      %v416 = vmul.f32 %v378, %v378
      %v417 = vmul.f32 %v381, %v381
      %v418 = vmul.f32 %v383, %v383
      %v419 = vmul.f32 %v386, %v386
      %v420 = vmul.f32 %v388, %v388
      %v421 = vmul.f32 %v391, %v391
      %v422 = vmul.f32 %v393, %v393
      %v423 = vmul.f32 %v396, %v396
      %v424 = vmul.f32 %v398, %v398
      %v425 = vmul.f32 %v401, %v401
      %v426 = vmul.f32 %v403, %v403
      %v427 = vmul.f32 %v406, %v406
      %v428 = vmul.f32 %v408, %v408
      %v429 = vmul.f32 %v411, %v411
      %v430 = vmul.f32 %v413, %v413
      %431 = vadd.xlane.f32.xlu0 %v415
      %v432 = vpop.xlane.xlu0 %431
      %433 = vadd.xlane.f32.xlu0 %v416
      %v434 = vpop.xlane.xlu0 %433
      %435 = vadd.xlane.f32.xlu0 %v417
      %v436 = vpop.xlane.xlu0 %435
      %437 = vadd.xlane.f32.xlu0 %v418
      %v438 = vpop.xlane.xlu0 %437
      %439 = vadd.xlane.f32.xlu0 %v419
      %v440 = vpop.xlane.xlu0 %439
      %441 = vadd.xlane.f32.xlu0 %v420
      %v442 = vpop.xlane.xlu0 %441
      %443 = vadd.xlane.f32.xlu0 %v421
      %v444 = vpop.xlane.xlu0 %443
      %445 = vadd.xlane.f32.xlu0 %v422
      %v446 = vpop.xlane.xlu0 %445
      %447 = vadd.xlane.f32.xlu0 %v423
      %v448 = vpop.xlane.xlu0 %447
      %449 = vadd.xlane.f32.xlu0 %v424
      %v450 = vpop.xlane.xlu0 %449
      %451 = vadd.xlane.f32.xlu0 %v425
      %v452 = vpop.xlane.xlu0 %451
      %453 = vadd.xlane.f32.xlu0 %v426
      %v454 = vpop.xlane.xlu0 %453
      %455 = vadd.xlane.f32.xlu0 %v427
      %v456 = vpop.xlane.xlu0 %455
      %457 = vadd.xlane.f32.xlu0 %v428
      %v458 = vpop.xlane.xlu0 %457
      %459 = vadd.xlane.f32.xlu0 %v429
      %v460 = vpop.xlane.xlu0 %459
      %461 = vadd.xlane.f32.xlu0 %v430
      %v462 = vpop.xlane.xlu0 %461
      %v463 = vmax.f32 %v432, 1e-24
      %v464 = vmax.f32 %v434, 1e-24
      %v465 = vmax.f32 %v436, 1e-24
      %v466 = vmax.f32 %v438, 1e-24
      %v467 = vmax.f32 %v440, 1e-24
      %v468 = vmax.f32 %v442, 1e-24
      %v469 = vmax.f32 %v444, 1e-24
      %v470 = vmax.f32 %v446, 1e-24
      %v471 = vmax.f32 %v448, 1e-24
      %v472 = vmax.f32 %v450, 1e-24
      %v473 = vmax.f32 %v452, 1e-24
      %v474 = vmax.f32 %v454, 1e-24
      %v475 = vmax.f32 %v456, 1e-24
      %v476 = vmax.f32 %v458, 1e-24
      %v477 = vmax.f32 %v460, 1e-24
      %v478 = vmax.f32 %v462, 1e-24
      %v479 = vrsqrt.pop %v463
      %v480 = vmul.f32 %v479, %v463
      %v481 = vmul.f32 %v480, %v479
      %v482 = vmul.f32 0.5, %v481
      %v483 = vsub.f32 1.5, %v482
      %v484 = vmul.f32 %v479, %v483
      %vm485 = vweird.f32 %v463
      %vm486 = vweird.f32 %v479
      %vm487 = vmor %vm485, %vm486
      %v488 = vsel %vm487, %v479, %v484
      %v489 = vrsqrt.pop %v464
      %v490 = vmul.f32 %v489, %v464
      %v491 = vmul.f32 %v490, %v489
      %v492 = vmul.f32 0.5, %v491
      %v493 = vsub.f32 1.5, %v492
      %v494 = vmul.f32 %v489, %v493
      %vm495 = vweird.f32 %v464
      %vm496 = vweird.f32 %v489
      %vm497 = vmor %vm495, %vm496
      %v498 = vsel %vm497, %v489, %v494
      %v499 = vrsqrt.pop %v465
      %v500 = vmul.f32 %v499, %v465
      %v501 = vmul.f32 %v500, %v499
      %v502 = vmul.f32 0.5, %v501
      %v503 = vsub.f32 1.5, %v502
      %v504 = vmul.f32 %v499, %v503
      %vm505 = vweird.f32 %v465
      %vm506 = vweird.f32 %v499
      %vm507 = vmor %vm505, %vm506
      %v508 = vsel %vm507, %v499, %v504
      %v509 = vrsqrt.pop %v466
      %v510 = vmul.f32 %v509, %v466
      %v511 = vmul.f32 %v510, %v509
      %v512 = vmul.f32 0.5, %v511
      %v513 = vsub.f32 1.5, %v512
      %v514 = vmul.f32 %v509, %v513
      %vm515 = vweird.f32 %v466
      %vm516 = vweird.f32 %v509
      %vm517 = vmor %vm515, %vm516
      %v518 = vsel %vm517, %v509, %v514
      %v519 = vrsqrt.pop %v467
      %v520 = vmul.f32 %v519, %v467
      %v521 = vmul.f32 %v520, %v519
      %v522 = vmul.f32 0.5, %v521
      %v523 = vsub.f32 1.5, %v522
      %v524 = vmul.f32 %v519, %v523
      %vm525 = vweird.f32 %v467
      %vm526 = vweird.f32 %v519
      %vm527 = vmor %vm525, %vm526
      %v528 = vsel %vm527, %v519, %v524
      %v529 = vrsqrt.pop %v468
      %v530 = vmul.f32 %v529, %v468
      %v531 = vmul.f32 %v530, %v529
      %v532 = vmul.f32 0.5, %v531
      %v533 = vsub.f32 1.5, %v532
      %v534 = vmul.f32 %v529, %v533
      %vm535 = vweird.f32 %v468
      %vm536 = vweird.f32 %v529
      %vm537 = vmor %vm535, %vm536
      %v538 = vsel %vm537, %v529, %v534
      %v539 = vrsqrt.pop %v469
      %v540 = vmul.f32 %v539, %v469
      %v541 = vmul.f32 %v540, %v539
      %v542 = vmul.f32 0.5, %v541
      %v543 = vsub.f32 1.5, %v542
      %v544 = vmul.f32 %v539, %v543
      %vm545 = vweird.f32 %v469
      %vm546 = vweird.f32 %v539
      %vm547 = vmor %vm545, %vm546
      %v548 = vsel %vm547, %v539, %v544
      %v549 = vrsqrt.pop %v470
      %v550 = vmul.f32 %v549, %v470
      %v551 = vmul.f32 %v550, %v549
      %v552 = vmul.f32 0.5, %v551
      %v553 = vsub.f32 1.5, %v552
      %v554 = vmul.f32 %v549, %v553
      %vm555 = vweird.f32 %v470
      %vm556 = vweird.f32 %v549
      %vm557 = vmor %vm555, %vm556
      %v558 = vsel %vm557, %v549, %v554
      %v559 = vrsqrt.pop %v471
      %v560 = vmul.f32 %v559, %v471
      %v561 = vmul.f32 %v560, %v559
      %v562 = vmul.f32 0.5, %v561
      %v563 = vsub.f32 1.5, %v562
      %v564 = vmul.f32 %v559, %v563
      %vm565 = vweird.f32 %v471
      %vm566 = vweird.f32 %v559
      %vm567 = vmor %vm565, %vm566
      %v568 = vsel %vm567, %v559, %v564
      %v569 = vrsqrt.pop %v472
      %v570 = vmul.f32 %v569, %v472
      %v571 = vmul.f32 %v570, %v569
      %v572 = vmul.f32 0.5, %v571
      %v573 = vsub.f32 1.5, %v572
      %v574 = vmul.f32 %v569, %v573
      %vm575 = vweird.f32 %v472
      %vm576 = vweird.f32 %v569
      %vm577 = vmor %vm575, %vm576
      %v578 = vsel %vm577, %v569, %v574
      %v579 = vrsqrt.pop %v473
      %v580 = vmul.f32 %v579, %v473
      %v581 = vmul.f32 %v580, %v579
      %v582 = vmul.f32 0.5, %v581
      %v583 = vsub.f32 1.5, %v582
      %v584 = vmul.f32 %v579, %v583
      %vm585 = vweird.f32 %v473
      %vm586 = vweird.f32 %v579
      %vm587 = vmor %vm585, %vm586
      %v588 = vsel %vm587, %v579, %v584
      %v589 = vrsqrt.pop %v474
      %v590 = vmul.f32 %v589, %v474
      %v591 = vmul.f32 %v590, %v589
      %v592 = vmul.f32 0.5, %v591
      %v593 = vsub.f32 1.5, %v592
      %v594 = vmul.f32 %v589, %v593
      %vm595 = vweird.f32 %v474
      %vm596 = vweird.f32 %v589
      %vm597 = vmor %vm595, %vm596
      %v598 = vsel %vm597, %v589, %v594
      %v599 = vrsqrt.pop %v475
      %v600 = vmul.f32 %v599, %v475
      %v601 = vmul.f32 %v600, %v599
      %v602 = vmul.f32 0.5, %v601
      %v603 = vsub.f32 1.5, %v602
      %v604 = vmul.f32 %v599, %v603
      %vm605 = vweird.f32 %v475
      %vm606 = vweird.f32 %v599
      %vm607 = vmor %vm605, %vm606
      %v608 = vsel %vm607, %v599, %v604
      %v609 = vrsqrt.pop %v476
      %v610 = vmul.f32 %v609, %v476
      %v611 = vmul.f32 %v610, %v609
      %v612 = vmul.f32 0.5, %v611
      %v613 = vsub.f32 1.5, %v612
      %v614 = vmul.f32 %v609, %v613
      %vm615 = vweird.f32 %v476
      %vm616 = vweird.f32 %v609
      %vm617 = vmor %vm615, %vm616
      %v618 = vsel %vm617, %v609, %v614
      %v619 = vrsqrt.pop %v477
      %v620 = vmul.f32 %v619, %v477
      %v621 = vmul.f32 %v620, %v619
      %v622 = vmul.f32 0.5, %v621
      %v623 = vsub.f32 1.5, %v622
      %v624 = vmul.f32 %v619, %v623
      %vm625 = vweird.f32 %v477
      %vm626 = vweird.f32 %v619
      %vm627 = vmor %vm625, %vm626
      %v628 = vsel %vm627, %v619, %v624
      %v629 = vrsqrt.pop %v478
      %v630 = vmul.f32 %v629, %v478
      %v631 = vmul.f32 %v630, %v629
      %v632 = vmul.f32 0.5, %v631
      %v633 = vsub.f32 1.5, %v632
      %v634 = vmul.f32 %v629, %v633
      %vm635 = vweird.f32 %v478
      %vm636 = vweird.f32 %v629
      %vm637 = vmor %vm635, %vm636
      %v638 = vsel %vm637, %v629, %v634
      %v639 = vmul.f32 %v376, %v488
      %v640 = vmul.f32 %v378, %v498
      %v641 = vmul.f32 %v381, %v508
      %v642 = vmul.f32 %v383, %v518
      %v643 = vmul.f32 %v386, %v528
      %v644 = vmul.f32 %v388, %v538
      %v645 = vmul.f32 %v391, %v548
      %v646 = vmul.f32 %v393, %v558
      %v647 = vmul.f32 %v396, %v568
      %v648 = vmul.f32 %v398, %v578
      %v649 = vmul.f32 %v401, %v588
      %v650 = vmul.f32 %v403, %v598
      %v651 = vmul.f32 %v406, %v608
      %v652 = vmul.f32 %v408, %v618
      %v653 = vmul.f32 %v411, %v628
      %v654 = vmul.f32 %v413, %v638
      %655 = vst [vmem:[#allocation2] sm:$0xff] %v639
      %656 = vst [vmem:[#allocation2 + $0x8] sm:$0xff] %v640
      %657 = vst [vmem:[#allocation2 + $0x10] sm:$0xff] %v641
      %658 = vst [vmem:[#allocation2 + $0x18] sm:$0xff] %v642
      %659 = vst [vmem:[#allocation2 + $0x20] sm:$0xff] %v643
      %660 = vst [vmem:[#allocation2 + $0x28] sm:$0xff] %v644
      %661 = vst [vmem:[#allocation2 + $0x30] sm:$0xff] %v645
      %662 = vst [vmem:[#allocation2 + $0x38] sm:$0xff] %v646
      %663 = vst [vmem:[#allocation2 + $0x40] sm:$0xff] %v647
      %664 = vst [vmem:[#allocation2 + $0x48] sm:$0xff] %v648
      %665 = vst [vmem:[#allocation2 + $0x50] sm:$0xff] %v649
      %666 = vst [vmem:[#allocation2 + $0x58] sm:$0xff] %v650
      %667 = vst [vmem:[#allocation2 + $0x60] sm:$0xff] %v651
      %668 = vst [vmem:[#allocation2 + $0x68] sm:$0xff] %v652
      %669 = vst [vmem:[#allocation2 + $0x70] sm:$0xff] %v653
      %670 = vst [vmem:[#allocation2 + $0x78] sm:$0xff] %v654
      %671 = vst [vmem:[%s12] sm:$0xff] %v639
      %672 = vst [vmem:[%s12 + $0x8] sm:$0xff] %v640
      %673 = vst [vmem:[%s12 + $0x10] sm:$0xff] %v641
      %674 = vst [vmem:[%s12 + $0x18] sm:$0xff] %v642
      %675 = vst [vmem:[%s12 + $0x20] sm:$0xff] %v643
      %676 = vst [vmem:[%s12 + $0x28] sm:$0xff] %v644
      %677 = vst [vmem:[%s12 + $0x30] sm:$0xff] %v645
      %678 = vst [vmem:[%s12 + $0x38] sm:$0xff] %v646
      %679 = vst [vmem:[%s12 + $0x40] sm:$0xff] %v647
      %680 = vst [vmem:[%s12 + $0x48] sm:$0xff] %v648
      %681 = vst [vmem:[%s12 + $0x50] sm:$0xff] %v649
      %682 = vst [vmem:[%s12 + $0x58] sm:$0xff] %v650
      %683 = vst [vmem:[%s12 + $0x60] sm:$0xff] %v651
      %684 = vst [vmem:[%s12 + $0x68] sm:$0xff] %v652
      %685 = vst [vmem:[%s12 + $0x70] sm:$0xff] %v653
      %686 = vst [vmem:[%s12 + $0x78] sm:$0xff] %v654
    $region61: #{clip_forward.1} parent=1 // pred_fallthru
      _
    %v687 = vld [vmem:[%s0] sm:$0xf]
    %v688 = vld [vmem:[%s0 + $0x4] sm:$0xf]
    %v689 = vld [vmem:[%s1] sm:$0xf]
    %v690 = vld [vmem:[%s1 + $0x4] sm:$0xf]
    %v691 = vld [vmem:[%s1 + $0x8] sm:$0xf]
    %v692 = vld [vmem:[%s1 + $0xc] sm:$0xf]
    %v693 = vld [vmem:[%s1 + $0x10] sm:$0xf]
    %v694 = vld [vmem:[%s1 + $0x14] sm:$0xf]
    %v695 = vld [vmem:[%s1 + $0x18] sm:$0xf]
    %v696 = vld [vmem:[%s1 + $0x1c] sm:$0xf]
    %v697 = vld [vmem:[%s1 + $0x20] sm:$0xf]
    %v698 = vld [vmem:[%s1 + $0x24] sm:$0xf]
    %v699 = vld [vmem:[%s1 + $0x28] sm:$0xf]
    %v700 = vld [vmem:[%s1 + $0x2c] sm:$0xf]
    %v701 = vld [vmem:[%s1 + $0x30] sm:$0xf]
    %v702 = vld [vmem:[%s1 + $0x34] sm:$0xf]
    %v703 = vld [vmem:[%s1 + $0x38] sm:$0xf]
    %v704 = vld [vmem:[%s1 + $0x3c] sm:$0xf]
    %v705 = vld [vmem:[%s2] sm:$0x1]
    %v706 = vld [vmem:[#allocation4] sm:$0xf]
    %v707 = vld [vmem:[#allocation4 + $0x4] sm:$0xf]
    %v708 = vld [vmem:[#allocation4 + $0x8] sm:$0xf]
    %v709 = vld [vmem:[#allocation4 + $0xc] sm:$0xf]
    %v710 = vld [vmem:[#allocation4 + $0x10] sm:$0xf]
    %v711 = vld [vmem:[#allocation4 + $0x14] sm:$0xf]
    %v712 = vld [vmem:[#allocation4 + $0x18] sm:$0xf]
    %v713 = vld [vmem:[#allocation4 + $0x1c] sm:$0xf]
    %v714 = vld [vmem:[#allocation4 + $0x20] sm:$0xf]
    %v715 = vld [vmem:[#allocation4 + $0x24] sm:$0xf]
    %v716 = vld [vmem:[#allocation4 + $0x28] sm:$0xf]
    %v717 = vld [vmem:[#allocation4 + $0x2c] sm:$0xf]
    %v718 = vld [vmem:[#allocation4 + $0x30] sm:$0xf]
    %v719 = vld [vmem:[#allocation4 + $0x34] sm:$0xf]
    %v720 = vld [vmem:[#allocation4 + $0x38] sm:$0xf]
    %v721 = vld [vmem:[#allocation4 + $0x3c] sm:$0xf]
    %v722 = vld [vmem:[%s4] sm:$0x1]
    %v724 = vperm.slane %v705, 0
    %v728 = vunpack.c.l.b16 %v687
    %v729 = vunpack.c.l.b16 %v688
    %v730 = vpack.c.b16 %v729, %v728
    %v748 = vunpack.c.l.b16 %v689
    %v749 = vunpack.c.l.b16 %v690
    %v750 = vunpack.c.l.b16 %v691
    %v751 = vunpack.c.l.b16 %v692
    %v752 = vunpack.c.l.b16 %v693
    %v753 = vunpack.c.l.b16 %v694
    %v754 = vunpack.c.l.b16 %v695
    %v755 = vunpack.c.l.b16 %v696
    %v756 = vunpack.c.l.b16 %v697
    %v757 = vunpack.c.l.b16 %v698
    %v758 = vunpack.c.l.b16 %v699
    %v759 = vunpack.c.l.b16 %v700
    %v760 = vunpack.c.l.b16 %v701
    %v761 = vunpack.c.l.b16 %v702
    %v762 = vunpack.c.l.b16 %v703
    %v763 = vunpack.c.l.b16 %v704
    %v764 = vpack.c.b16 %v749, %v748
    %v765 = vpack.c.b16 %v751, %v750
    %v766 = vpack.c.b16 %v753, %v752
    %v767 = vpack.c.b16 %v755, %v754
    %v768 = vpack.c.b16 %v757, %v756
    %v769 = vpack.c.b16 %v759, %v758
    %v770 = vpack.c.b16 %v761, %v760
    %v771 = vpack.c.b16 %v763, %v762
    %780 = vmatpush.bf16.msra.mxu0 %v771
    %781 = vmatpush.bf16.msra.mxu0 %v770
    %782 = vmatpush.bf16.msra.mxu0 %v769
    %783 = vmatpush.bf16.msra.mxu0 %v768
    %784 = vmatpush.bf16.msra.mxu0 %v767
    %785 = vmatpush.bf16.msra.mxu0 %v766
    %786 = vmatpush.bf16.msra.mxu0 %v765
    %787 = vmatpush.bf16.msra.mxu0 %v764
    %788 = vmatmul.bf16.gmra.mxu0 %v730
    %v789 = vpop.f32.mrf.mxu0
    %v790 = vadd.f32 %v724, %v789
    %v791 = vpop.f32.mrf.mxu0
    %v792 = vadd.f32 %v724, %v791
    %793 = vdwg.mxu0
    %v794 = vmax.f32 %v790, 0.0
    %v795 = vmax.f32 %v792, 0.0
    %v796 = vpack.c.bf16 %v795, %v794
    %v798 = vperm.slane %v722, 0
    %v816 = vunpack.c.l.b16 %v706
    %v817 = vunpack.c.l.b16 %v707
    %v818 = vunpack.c.l.b16 %v708
    %v819 = vunpack.c.l.b16 %v709
    %v820 = vunpack.c.l.b16 %v710
    %v821 = vunpack.c.l.b16 %v711
    %v822 = vunpack.c.l.b16 %v712
    %v823 = vunpack.c.l.b16 %v713
    %v824 = vunpack.c.l.b16 %v714
    %v825 = vunpack.c.l.b16 %v715
    %v826 = vunpack.c.l.b16 %v716
    %v827 = vunpack.c.l.b16 %v717
    %v828 = vunpack.c.l.b16 %v718
    %v829 = vunpack.c.l.b16 %v719
    %v830 = vunpack.c.l.b16 %v720
    %v831 = vunpack.c.l.b16 %v721
    %v832 = vpack.c.b16 %v817, %v816
    %v833 = vpack.c.b16 %v819, %v818
    %v834 = vpack.c.b16 %v821, %v820
    %v835 = vpack.c.b16 %v823, %v822
    %v836 = vpack.c.b16 %v825, %v824
    %v837 = vpack.c.b16 %v827, %v826
    %v838 = vpack.c.b16 %v829, %v828
    %v839 = vpack.c.b16 %v831, %v830
    %848 = vmatpush.bf16.msra.mxu0 %v839
    %849 = vmatpush.bf16.msra.mxu0 %v838
    %850 = vmatpush.bf16.msra.mxu0 %v837
    %851 = vmatpush.bf16.msra.mxu0 %v836
    %852 = vmatpush.bf16.msra.mxu0 %v835
    %853 = vmatpush.bf16.msra.mxu0 %v834
    %854 = vmatpush.bf16.msra.mxu0 %v833
    %855 = vmatpush.bf16.msra.mxu0 %v832
    %856 = vmatmul.bf16.gmra.mxu0 %v796
    %v857 = vpop.f32.mrf.mxu0
    %v858 = vadd.f32 %v798, %v857
    %v859 = vpop.f32.mrf.mxu0
    %v860 = vadd.f32 %v798, %v859
    %861 = vdwg.mxu0
    %v862 = vmul.f32 %v858, %v858
    %v863 = vmul.f32 %v860, %v860
    %864 = vadd.xlane.f32.xlu0 %v862
    %v865 = vpop.xlane.xlu0 %864
    %866 = vadd.xlane.f32.xlu0 %v863
    %v867 = vpop.xlane.xlu0 %866
    %v868 = vmax.f32 %v865, 1e-24
    %v869 = vmax.f32 %v867, 1e-24
    %v870 = vrsqrt.pop %v868
    %v871 = vmul.f32 %v870, %v868
    %v872 = vmul.f32 %v871, %v870
    %v873 = vmul.f32 0.5, %v872
    %v874 = vsub.f32 1.5, %v873
    %v875 = vmul.f32 %v870, %v874
    %vm876 = vweird.f32 %v868
    %vm877 = vweird.f32 %v870
    %vm878 = vmor %vm876, %vm877
    %v879 = vsel %vm878, %v870, %v875
    %v880 = vrsqrt.pop %v869
    %v881 = vmul.f32 %v880, %v869
    %v882 = vmul.f32 %v881, %v880
    %v883 = vmul.f32 0.5, %v882
    %v884 = vsub.f32 1.5, %v883
    %v885 = vmul.f32 %v880, %v884
    %vm886 = vweird.f32 %v869
    %vm887 = vweird.f32 %v880
    %vm888 = vmor %vm886, %vm887
    %v889 = vsel %vm888, %v880, %v885
    %v890 = vmul.f32 %v858, %v879
    %v891 = vmul.f32 %v860, %v889
    %892 = vst [vmem:[%s11] sm:$0xff] %v890
    %893 = vst [vmem:[%s11 + $0x8] sm:$0xff] %v891
    %v894 = vld [vmem:[#allocation2] sm:$0xff]
    %v895 = vld [vmem:[#allocation2 + $0x8] sm:$0xff]
    %v896 = vld [vmem:[#allocation2 + $0x10] sm:$0xff]
    %v897 = vld [vmem:[#allocation2 + $0x18] sm:$0xff]
    %v898 = vld [vmem:[#allocation2 + $0x20] sm:$0xff]
    %v899 = vld [vmem:[#allocation2 + $0x28] sm:$0xff]
    %v900 = vld [vmem:[#allocation2 + $0x30] sm:$0xff]
    %v901 = vld [vmem:[#allocation2 + $0x38] sm:$0xff]
    %v902 = vld [vmem:[#allocation2 + $0x40] sm:$0xff]
    %v903 = vld [vmem:[#allocation2 + $0x48] sm:$0xff]
    %v904 = vld [vmem:[#allocation2 + $0x50] sm:$0xff]
    %v905 = vld [vmem:[#allocation2 + $0x58] sm:$0xff]
    %v906 = vld [vmem:[#allocation2 + $0x60] sm:$0xff]
    %v907 = vld [vmem:[#allocation2 + $0x68] sm:$0xff]
    %v908 = vld [vmem:[#allocation2 + $0x70] sm:$0xff]
    %v909 = vld [vmem:[#allocation2 + $0x78] sm:$0xff]
    %910 = vmatpush.xpose.msra.mxu0 %v909
    %911 = vmatpush.xpose.msra.mxu0 %v908
    %912 = vmatpush.xpose.msra.mxu0 %v907
    %913 = vmatpush.xpose.msra.mxu0 %v906
    %914 = vmatpush.xpose.msra.mxu0 %v905
    %915 = vmatpush.xpose.msra.mxu0 %v904
    %916 = vmatpush.xpose.msra.mxu0 %v903
    %917 = vmatpush.xpose.msra.mxu0 %v902
    %918 = vmatpush.xpose.msra.mxu0 %v901
    %919 = vmatpush.xpose.msra.mxu0 %v900
    %920 = vmatpush.xpose.msra.mxu0 %v899
    %921 = vmatpush.xpose.msra.mxu0 %v898
    %922 = vmatpush.xpose.msra.mxu0 %v897
    %923 = vmatpush.xpose.msra.mxu0 %v896
    %924 = vmatpush.xpose.msra.mxu0 %v895
    %925 = vmatpush.xpose.msra.mxu0 %v894
    %926 = vmatmul.f32.gmra.mxu0 %v890
    %v927 = vpop.f32.mrf.mxu0
    %v928 = vadd.f32 0.0, %v927
    %929 = vmatmul.f32.gmra.mxu0 %v891
    %v930 = vpop.f32.mrf.mxu0
    %v931 = vadd.f32 0.0, %v930
    %932 = vdwg.mxu0
    %s933 = sld [smem:[#allocation3]]
    %v934 = vstv %s933
    %v935 = vmul.f32 %v928, %v934
    %v936 = vmul.f32 %v931, %v934
    %937 = vst [vmem:[%s13] sm:$0xff] %v935
    %938 = vst [vmem:[%s13 + $0x8] sm:$0xff] %v936
    // Predicated region
    $region62: #{clip_forward.1} parent=1 // pred_check
      _
    $region63: #{clip_forward.1} parent=1 // pred_check_branch
      %940 = sbr.rel (0) target = $region65
    $region64: #{clip_forward.1} parent=1 // pred_region
      _
    $region65: #{clip_forward.1} parent=1 // pred_fallthru
      _
    // Predicated region
    $region66: #{clip_forward.1} parent=1 // pred_check
      _
    $region67: #{clip_forward.1} parent=1 // pred_check_branch
      %942 = sbr.rel (0) target = $region69
    $region68: #{clip_forward.1} parent=1 // pred_region
      _
    $region69: #{clip_forward.1} parent=1 // pred_fallthru
      _
    // Predicated region
    $region70: #{clip_forward.1} parent=1 // pred_check
      _
    $region71: #{clip_forward.1} parent=1 // pred_check_branch
      %944 = sbr.rel (0) target = $region73
    $region72: #{clip_forward.1} parent=1 // pred_region
      _
    $region73: #{clip_forward.1} parent=1 // pred_fallthru
      _
    // Predicated region
    $region74: #{clip_forward.1} parent=1 // pred_check
      _
    $region75: #{clip_forward.1} parent=1 // pred_check_branch
      %946 = sbr.rel (0) target = $region77
    $region76: #{clip_forward.1} parent=1 // pred_region
      _
    $region77: #{clip_forward.1} parent=1 // pred_fallthru
      _
    // Predicated region
    $region78: #{clip_forward.1} parent=1 // pred_check
      _
    $region79: #{clip_forward.1} parent=1 // pred_check_branch
      %948 = sbr.rel (0) target = $region81
    $region80: #{clip_forward.1} parent=1 // pred_region
      _
    $region81: #{clip_forward.1} parent=1 // pred_fallthru
      _
    // Predicated region
    $region82: #{clip_forward.1} parent=1 // pred_check
      _
    $region83: #{clip_forward.1} parent=1 // pred_check_branch
      %950 = sbr.rel (0) target = $region85
    $region84: #{clip_forward.1} parent=1 // pred_region
      _
    $region85: #{clip_forward.1} parent=1 // pred_fallthru
      _
    %951 = vsyncpa [#allocation5], 1
    %952 = vsyncpa [#allocation7], 1

</llo_original>
